<compile_context>
chip_gen: v7x
topology: tpu7x:2x2x1
jax: 0.10.0
libtpu: 0.0.40
codegen_flags: <defaults>
</compile_context>

<pallas_src>
import math

import jax
import jax.numpy as jnp
from jax.experimental import pallas as pl
from jax.experimental.pallas import tpu as pltpu

# ----------------------------- config (small) -------------------------------
BATCH = 2
SEQ = 8                      # must be divisible by NUM_HEADS (module's view requires it)
HIDDEN = 32                  # config.hidden_size
NUM_HEADS = 2                # config.num_attention_heads
INTERMEDIATE = 16            # config.intermediate_size == key_size
MLP_HIDDEN = 64              # config.mlp_hidden_size
HEAD_DIM = HIDDEN // NUM_HEADS
LN_EPS = 1e-5
LANE = 128                   # TPU lane width; Q/K/V/ctx intermediates padded to it
TOKENS = BATCH * SEQ         # 16

# packed-buffer layout (all row offsets 8-aligned)
ROW_WO, ROW_W1, ROW_W2 = 0, LANE, LANE + HIDDEN
WREST_ROWS = LANE + HIDDEN + MLP_HIDDEN          # 224
WREST_COLS = MLP_HIDDEN                          # 64

ROW_BQKV, ROW_BO, ROW_GAMMA, ROW_BETA, ROW_B1, ROW_B2, ROW_MASK = 0, 8, 16, 24, 32, 40, 48
VECS_ROWS = ROW_MASK + TOKENS                    # 64
VECS_COLS = 3 * LANE                             # 384


# ------------------------------ Pallas kernel --------------------------------
def fused_encoder_kernel(x_ref, wqkv_ref, wrest_ref, vecs_ref, out_ref):
    """Whole encoder layer on (B*S, D) tokens, fully VMEM-resident, 2-D matmuls only."""
    D, M, BS = HIDDEN, MLP_HIDDEN, TOKENS
    x = x_ref[...]                                            # (BS, D)

    # ---- fused Q/K/V projection: one MXU matmul, lane-dense (N = 3*128) ----
    # (1/sqrt(head_dim) is folded into the Q columns of wqkv / its bias host-side.)
    qkv = (jnp.dot(x, wqkv_ref[...], preferred_element_type=jnp.float32)
           + vecs_ref[ROW_BQKV:ROW_BQKV + 1, :])
    q = qkv[:, 0 * LANE:1 * LANE]                             # (BS, 128), zero past I
    k = qkv[:, 1 * LANE:2 * LANE]
    v = qkv[:, 2 * LANE:3 * LANE]

    # ---- attention: batch + sequence-dim head split folded into a static ----
    # ---- additive mask bias -> plain 2-D matmuls on a (16,16) score tile ----
    s = jnp.dot(q, k.T, preferred_element_type=jnp.float32)   # (BS, BS)
    s = s + vecs_ref[ROW_MASK:ROW_MASK + BS, 0:BS]            # -1e30 where disallowed
    m = jnp.max(s, axis=-1, keepdims=True)
    e = jnp.exp(s - m)
    p = e / jnp.sum(e, axis=-1, keepdims=True)
    ctx = jnp.dot(p, v, preferred_element_type=jnp.float32)   # (BS, 128)

    # ---- out_proj + residual + LayerNorm ----
    attn = (jnp.dot(ctx, wrest_ref[ROW_WO:ROW_WO + LANE, 0:D],
                    preferred_element_type=jnp.float32)
            + vecs_ref[ROW_BO:ROW_BO + 1, 0:D])
    h = x + attn
    mean = jnp.mean(h, axis=-1, keepdims=True)
    var = jnp.mean((h - mean) ** 2, axis=-1, keepdims=True)
    hn = ((h - mean) * jax.lax.rsqrt(var + LN_EPS)
          * vecs_ref[ROW_GAMMA:ROW_GAMMA + 1, 0:D]
          + vecs_ref[ROW_BETA:ROW_BETA + 1, 0:D])

    # ---- FFN (Linear -> ReLU -> Linear) + residual ----
    a = jnp.maximum(
        jnp.dot(hn, wrest_ref[ROW_W1:ROW_W1 + D, 0:M],
                preferred_element_type=jnp.float32)
        + vecs_ref[ROW_B1:ROW_B1 + 1, 0:M],
        0.0)
    ffn = (jnp.dot(a, wrest_ref[ROW_W2:ROW_W2 + M, 0:D],
                   preferred_element_type=jnp.float32)
           + vecs_ref[ROW_B2:ROW_B2 + 1, 0:D])
    out_ref[...] = hn + ffn


# ------------------------------ host-side prep --------------------------------
def prepare_fused_params(p):
    """One-time weight prep: scale fold, QKV fusion, and packing 10 params + the
    static attention-mask bias into 3 lane/sublane-aligned buffers."""
    assert SEQ % NUM_HEADS == 0
    scale = 1.0 / math.sqrt(float(HEAD_DIM))
    D, I, M, BS = HIDDEN, INTERMEDIATE, MLP_HIDDEN, TOKENS

    def pad_to(a, rows, cols):
        return jnp.pad(a, ((0, rows - a.shape[0]), (0, cols - a.shape[1])))

    # fused Q/K/V weight: each projection zero-padded to 128 lanes (exact zeros downstream)
    wqkv = jnp.concatenate([pad_to(p["wq"] * scale, D, LANE),
                            pad_to(p["wk"], D, LANE),
                            pad_to(p["wv"], D, LANE)], axis=1)          # (32, 384)

    # remaining weights stacked row-wise into one slab
    w_rest = jnp.zeros((WREST_ROWS, WREST_COLS), jnp.float32)
    w_rest = w_rest.at[ROW_WO:ROW_WO + LANE, 0:D].set(pad_to(p["wo"], LANE, D))
    w_rest = w_rest.at[ROW_W1:ROW_W1 + D, 0:M].set(p["w1"])
    w_rest = w_rest.at[ROW_W2:ROW_W2 + M, 0:D].set(p["w2"])

    # all bias/scale vectors + the static additive attention mask, one buffer
    vecs = jnp.zeros((VECS_ROWS, VECS_COLS), jnp.float32)
    bqkv = jnp.concatenate([pad_to(p["bq"] * scale, 1, LANE),
                            pad_to(p["bk"], 1, LANE),
                            pad_to(p["bv"], 1, LANE)], axis=1)          # (1, 384)
    vecs = vecs.at[ROW_BQKV, :].set(bqkv[0])
    vecs = vecs.at[ROW_BO, 0:D].set(p["bo"][0])
    vecs = vecs.at[ROW_GAMMA, 0:D].set(p["gamma"][0])
    vecs = vecs.at[ROW_BETA, 0:D].set(p["beta"][0])
    vecs = vecs.at[ROW_B1, 0:M].set(p["b1"][0])
    vecs = vecs.at[ROW_B2, 0:D].set(p["b2"][0])

    # The module's head split over the *sequence* dim (key_size == intermediate_size)
    # is exactly: token r attends to token c iff same batch and (r % H) == (c % H).
    idx = jnp.arange(BS)
    allowed = (((idx[:, None] % NUM_HEADS) == (idx[None, :] % NUM_HEADS))
               & ((idx[:, None] // SEQ) == (idx[None, :] // SEQ)))
    mask_bias = jnp.where(allowed, 0.0, -1e30).astype(jnp.float32)      # (16, 16)
    vecs = vecs.at[ROW_MASK:ROW_MASK + BS, 0:BS].set(mask_bias)

    return {"wqkv": wqkv, "w_rest": w_rest, "vecs": vecs}


# ------------------------------ wrapper ---------------------------------------
@jax.jit
def transformer_encoder_layer(src, fp):
    """Single fused, gridless pallas_call; whole working set (<0.3 MiB) VMEM-resident."""
    B, S, D = src.shape
    x2d = src.reshape(B * S, D)
    vmem = pl.BlockSpec(memory_space=pltpu.MemorySpace.VMEM)
    out2d = pl.pallas_call(
        fused_encoder_kernel,
        out_shape=jax.ShapeDtypeStruct((B * S, D), jnp.float32),
        in_specs=[vmem] * 4,
        out_specs=vmem,
        input_output_aliases={0: 0},      # reuse x2d's HBM buffer for the output
    )(x2d, fp["wqkv"], fp["w_rest"], fp["vecs"])
    return out2d.reshape(B, S, D)


# --------------------------- pure-JAX reference -------------------------------
def reference(src, p):
    B, S, D = src.shape
    H, T, I = NUM_HEADS, SEQ // NUM_HEADS, INTERMEDIATE
    x = src
    q = x @ p["wq"] + p["bq"]
    k = x @ p["wk"] + p["bk"]
    v = x @ p["wv"] + p["bv"]

    def sh(t):
        return t.reshape(B, T, H, I).transpose(0, 2, 1, 3)

    q, k, v = sh(q), sh(k), sh(v)
    s = jnp.einsum("bhti,bhsi->bhts", q, k) / math.sqrt(float(HEAD_DIM))
    s = jax.nn.softmax(s, axis=-1)
    ctx = jnp.einsum("bhts,bhsi->bhti", s, v)
    ctx = ctx.transpose(0, 2, 1, 3).reshape(B, S, I)
    attn_out = ctx @ p["wo"] + p["bo"]
    h = x + attn_out
    mean = jnp.mean(h, axis=-1, keepdims=True)
    var = jnp.mean((h - mean) ** 2, axis=-1, keepdims=True)
    hn = (h - mean) / jnp.sqrt(var + LN_EPS) * p["gamma"] + p["beta"]
    ffn = jnp.maximum(hn @ p["w1"] + p["b1"], 0.0) @ p["w2"] + p["b2"]
    return hn + ffn


# --------------------------------- params -------------------------------------
def init_params(key):
    ks = jax.random.split(key, 12)
    u = lambda k, shape, fan_in: jax.random.uniform(
        k, shape, jnp.float32, -1.0 / math.sqrt(fan_in), 1.0 / math.sqrt(fan_in))
    D, I, M = HIDDEN, INTERMEDIATE, MLP_HIDDEN
    return {
        # weights stored as (in, out); biases as (1, out)
        "wq": u(ks[0], (D, I), D), "bq": u(ks[1], (1, I), D),
        "wk": u(ks[2], (D, I), D), "bk": u(ks[3], (1, I), D),
        "wv": u(ks[4], (D, I), D), "bv": u(ks[5], (1, I), D),
        "wo": u(ks[6], (I, D), I), "bo": u(ks[7], (1, D), I),
        "w1": u(ks[8], (D, M), D), "b1": u(ks[9], (1, M), D),
        "w2": u(ks[10], (M, D), M), "b2": u(ks[11], (1, D), M),
        "gamma": jnp.ones((1, D), jnp.float32),
        "beta": jnp.zeros((1, D), jnp.float32),
    }


if __name__ == "__main__":
    key = jax.random.PRNGKey(0)
    k_src, k_par = jax.random.split(key)
    src = jax.random.normal(k_src, (BATCH, SEQ, HIDDEN), dtype=jnp.float32)
    params = init_params(k_par)
    fused_params = prepare_fused_params(params)   # one-time host-side prep

    out = transformer_encoder_layer(src, fused_params)
    out = jax.block_until_ready(out)

    ref = reference(src, params)
    assert out.shape == (BATCH, SEQ, HIDDEN)
    assert jnp.allclose(out, ref, atol=1e-4, rtol=1e-4), (
        float(jnp.max(jnp.abs(out - ref))))
    print("KERNEL_OK")
</pallas_src>

<mosaic_0001>
module attributes {stable_mosaic.version = 11 : i64} {
  func.func @fused_encoder_kernel(%arg0: memref<16x32xf32, #tpu.memory_space<vmem>>, %arg1: memref<32x384xf32, #tpu.memory_space<vmem>>, %arg2: memref<224x64xf32, #tpu.memory_space<vmem>>, %arg3: memref<64x384xf32, #tpu.memory_space<vmem>>, %arg4: memref<16x32xf32, #tpu.memory_space<vmem>>) attributes {dimension_semantics = [], scalar_prefetch = 0 : i64, scratch_operands = 0 : i64, tpu.core_type = #tpu.core_type<tc>} {
    %c0 = arith.constant 0 : index
    %c0_0 = arith.constant 0 : index
    %0 = vector.load %arg0[%c0, %c0_0] : memref<16x32xf32, #tpu.memory_space<vmem>>, vector<16x32xf32>
    %c0_1 = arith.constant 0 : index
    %c0_2 = arith.constant 0 : index
    %1 = vector.load %arg1[%c0_1, %c0_2] : memref<32x384xf32, #tpu.memory_space<vmem>>, vector<32x384xf32>
    %cst = arith.constant dense<0.000000e+00> : vector<16x384xf32>
    %2 = tpu.matmul %0, %1, %cst {dimension_numbers = #tpu.dot_dimension_numbers<[1], [0], [0], [1], [0, 0, 1, 1], [], []>} : vector<16x32xf32>, vector<32x384xf32>, vector<16x384xf32> -> vector<16x384xf32>
    %c0_3 = arith.constant 0 : index
    %c0_4 = arith.constant 0 : index
    %3 = vector.load %arg3[%c0_3, %c0_4] : memref<64x384xf32, #tpu.memory_space<vmem>>, vector<1x384xf32>
    %4 = vector.broadcast %3 : vector<1x384xf32> to vector<16x384xf32>
    %5 = arith.addf %2, %4 : vector<16x384xf32>
    %6 = vector.extract_strided_slice %5 {offsets = [0, 0], sizes = [16, 128], strides = [1, 1]} : vector<16x384xf32> to vector<16x128xf32>
    %7 = vector.extract_strided_slice %5 {offsets = [0, 128], sizes = [16, 128], strides = [1, 1]} : vector<16x384xf32> to vector<16x128xf32>
    %8 = vector.extract_strided_slice %5 {offsets = [0, 256], sizes = [16, 128], strides = [1, 1]} : vector<16x384xf32> to vector<16x128xf32>
    %9 = tpu.transpose %7, [1, 0] : vector<16x128xf32> -> vector<128x16xf32>
    %cst_5 = arith.constant dense<0.000000e+00> : vector<16x16xf32>
    %10 = tpu.matmul %6, %9, %cst_5 {dimension_numbers = #tpu.dot_dimension_numbers<[1], [0], [0], [1], [0, 0, 1, 1], [], []>} : vector<16x128xf32>, vector<128x16xf32>, vector<16x16xf32> -> vector<16x16xf32>
    %c48 = arith.constant 48 : index
    %c0_6 = arith.constant 0 : index
    %11 = vector.load %arg3[%c48, %c0_6] : memref<64x384xf32, #tpu.memory_space<vmem>>, vector<16x16xf32>
    %12 = arith.addf %10, %11 : vector<16x16xf32>
    %cst_7 = arith.constant dense<0xFF800000> : vector<16xf32>
    %13 = vector.multi_reduction <maximumf>, %12, %cst_7 [1] : vector<16x16xf32> to vector<16xf32>
    %14 = vector.shape_cast %13 : vector<16xf32> to vector<16x1xf32>
    %15 = vector.broadcast %14 : vector<16x1xf32> to vector<16x16xf32>
    %16 = arith.subf %12, %15 : vector<16x16xf32>
    %17 = math.exp %16 : vector<16x16xf32>
    %cst_8 = arith.constant dense<0.000000e+00> : vector<16xf32>
    %18 = vector.multi_reduction <add>, %17, %cst_8 [1] : vector<16x16xf32> to vector<16xf32>
    %19 = vector.shape_cast %18 : vector<16xf32> to vector<16x1xf32>
    %20 = vector.broadcast %19 : vector<16x1xf32> to vector<16x16xf32>
    %21 = arith.divf %17, %20 : vector<16x16xf32>
    %cst_9 = arith.constant dense<0.000000e+00> : vector<16x128xf32>
    %22 = tpu.matmul %21, %8, %cst_9 {dimension_numbers = #tpu.dot_dimension_numbers<[1], [0], [0], [1], [0, 0, 1, 1], [], []>} : vector<16x16xf32>, vector<16x128xf32>, vector<16x128xf32> -> vector<16x128xf32>
    %c0_10 = arith.constant 0 : index
    %c0_11 = arith.constant 0 : index
    %23 = vector.load %arg2[%c0_10, %c0_11] : memref<224x64xf32, #tpu.memory_space<vmem>>, vector<128x32xf32>
    %cst_12 = arith.constant dense<0.000000e+00> : vector<16x32xf32>
    %24 = tpu.matmul %22, %23, %cst_12 {dimension_numbers = #tpu.dot_dimension_numbers<[1], [0], [0], [1], [0, 0, 1, 1], [], []>} : vector<16x128xf32>, vector<128x32xf32>, vector<16x32xf32> -> vector<16x32xf32>
    %c8 = arith.constant 8 : index
    %c0_13 = arith.constant 0 : index
    %25 = vector.load %arg3[%c8, %c0_13] : memref<64x384xf32, #tpu.memory_space<vmem>>, vector<1x32xf32>
    %26 = vector.broadcast %25 : vector<1x32xf32> to vector<16x32xf32>
    %27 = arith.addf %24, %26 : vector<16x32xf32>
    %28 = arith.addf %0, %27 : vector<16x32xf32>
    %cst_14 = arith.constant dense<0.000000e+00> : vector<16xf32>
    %29 = vector.multi_reduction <add>, %28, %cst_14 [1] : vector<16x32xf32> to vector<16xf32>
    %30 = vector.shape_cast %29 : vector<16xf32> to vector<16x1xf32>
    %cst_15 = arith.constant 3.200000e+01 : f32
    %31 = vector.broadcast %cst_15 : f32 to vector<16x1xf32>
    %32 = arith.divf %30, %31 : vector<16x1xf32>
    %33 = vector.broadcast %32 : vector<16x1xf32> to vector<16x32xf32>
    %34 = arith.subf %28, %33 : vector<16x32xf32>
    %35 = arith.mulf %34, %34 : vector<16x32xf32>
    %cst_16 = arith.constant dense<0.000000e+00> : vector<16xf32>
    %36 = vector.multi_reduction <add>, %35, %cst_16 [1] : vector<16x32xf32> to vector<16xf32>
    %37 = vector.shape_cast %36 : vector<16xf32> to vector<16x1xf32>
    %cst_17 = arith.constant 3.200000e+01 : f32
    %38 = vector.broadcast %cst_17 : f32 to vector<16x1xf32>
    %39 = arith.divf %37, %38 : vector<16x1xf32>
    %40 = vector.broadcast %32 : vector<16x1xf32> to vector<16x32xf32>
    %41 = arith.subf %28, %40 : vector<16x32xf32>
    %cst_18 = arith.constant 9.99999974E-6 : f32
    %42 = vector.broadcast %cst_18 : f32 to vector<16x1xf32>
    %43 = arith.addf %39, %42 : vector<16x1xf32>
    %44 = math.rsqrt %43 : vector<16x1xf32>
    %45 = vector.broadcast %44 : vector<16x1xf32> to vector<16x32xf32>
    %46 = arith.mulf %41, %45 : vector<16x32xf32>
    %c16 = arith.constant 16 : index
    %c0_19 = arith.constant 0 : index
    %47 = vector.load %arg3[%c16, %c0_19] : memref<64x384xf32, #tpu.memory_space<vmem>>, vector<1x32xf32>
    %48 = vector.broadcast %47 : vector<1x32xf32> to vector<16x32xf32>
    %49 = arith.mulf %46, %48 : vector<16x32xf32>
    %c24 = arith.constant 24 : index
    %c0_20 = arith.constant 0 : index
    %50 = vector.load %arg3[%c24, %c0_20] : memref<64x384xf32, #tpu.memory_space<vmem>>, vector<1x32xf32>
    %51 = vector.broadcast %50 : vector<1x32xf32> to vector<16x32xf32>
    %52 = arith.addf %49, %51 : vector<16x32xf32>
    %c128 = arith.constant 128 : index
    %c0_21 = arith.constant 0 : index
    %53 = vector.load %arg2[%c128, %c0_21] : memref<224x64xf32, #tpu.memory_space<vmem>>, vector<32x64xf32>
    %cst_22 = arith.constant dense<0.000000e+00> : vector<16x64xf32>
    %54 = tpu.matmul %52, %53, %cst_22 {dimension_numbers = #tpu.dot_dimension_numbers<[1], [0], [0], [1], [0, 0, 1, 1], [], []>} : vector<16x32xf32>, vector<32x64xf32>, vector<16x64xf32> -> vector<16x64xf32>
    %c32 = arith.constant 32 : index
    %c0_23 = arith.constant 0 : index
    %55 = vector.load %arg3[%c32, %c0_23] : memref<64x384xf32, #tpu.memory_space<vmem>>, vector<1x64xf32>
    %56 = vector.broadcast %55 : vector<1x64xf32> to vector<16x64xf32>
    %57 = arith.addf %54, %56 : vector<16x64xf32>
    %cst_24 = arith.constant 0.000000e+00 : f32
    %58 = vector.broadcast %cst_24 : f32 to vector<16x64xf32>
    %59 = arith.maximumf %57, %58 : vector<16x64xf32>
    %c160 = arith.constant 160 : index
    %c0_25 = arith.constant 0 : index
    %60 = vector.load %arg2[%c160, %c0_25] : memref<224x64xf32, #tpu.memory_space<vmem>>, vector<64x32xf32>
    %cst_26 = arith.constant dense<0.000000e+00> : vector<16x32xf32>
    %61 = tpu.matmul %59, %60, %cst_26 {dimension_numbers = #tpu.dot_dimension_numbers<[1], [0], [0], [1], [0, 0, 1, 1], [], []>} : vector<16x64xf32>, vector<64x32xf32>, vector<16x32xf32> -> vector<16x32xf32>
    %c40 = arith.constant 40 : index
    %c0_27 = arith.constant 0 : index
    %62 = vector.load %arg3[%c40, %c0_27] : memref<64x384xf32, #tpu.memory_space<vmem>>, vector<1x32xf32>
    %63 = vector.broadcast %62 : vector<1x32xf32> to vector<16x32xf32>
    %64 = arith.addf %61, %63 : vector<16x32xf32>
    %65 = arith.addf %52, %64 : vector<16x32xf32>
    %c0_28 = arith.constant 0 : index
    %c0_29 = arith.constant 0 : index
    %66 = vector.load %arg4[%c0_28, %c0_29] : memref<16x32xf32, #tpu.memory_space<vmem>>, vector<16x32xf32>
    tpu.vector_store %arg4[%c0_28, %c0_29], %65 {strides = array<i32>} : memref<16x32xf32, #tpu.memory_space<vmem>>, vector<16x32xf32>,
    return
  }
}

</mosaic_0001>

<llo_original>
// kernel: transformer_encoder_layer.1
$region0: #{transformer_encoder_layer.1}
  #allocation0 [shape = 'u32[]', space=smem, size = 0x4, offset = 0x4, fixed_abs, tag = 'smem constant byte address 0x4 - core index']
  #allocation1 [shape = 'u32[144,128]{1,0:T(1,128)}', space=vmem, size = 0x12000, scoped, tag = 'internal scratch']
  %s0 = inlined_call_operand.vmem [shape: f32[16,32], index: 0, kind: input, shape index: {}, may-alias: {0,4}]
  %s1 = inlined_call_operand.vmem [shape: f32[32,384], index: 1, kind: input, shape index: {}]
  %s2 = inlined_call_operand.vmem [shape: f32[224,64], index: 2, kind: input, shape index: {}]
  %s3 = inlined_call_operand.vmem [shape: f32[64,384], index: 3, kind: input, shape index: {}]
  %s4 = inlined_call_operand.vmem [shape: f32[16,32], index: 4, kind: output, shape index: {}, may-alias: {0,4}]
  %s5 = sld [smem:[#allocation0]]
  $region26: #{transformer_encoder_layer.1} parent=0
    _
  %s7 = ssub.s32 1, %s5
  %s8 = scalar_select 0, %s7, %s5
  // Predicated region
  $region2: #{transformer_encoder_layer.1} parent=0 // pred_check
    _
  $region3: #{transformer_encoder_layer.1} parent=0 // pred_check_branch
    %10 = sbr.rel (0) target = $region5
  $region4: #{transformer_encoder_layer.1} parent=0 // pred_region
    _
  $region5: #{transformer_encoder_layer.1} parent=0 // pred_fallthru
    _
  // Predicated region
  $region6: #{transformer_encoder_layer.1} parent=0 // pred_check
    _
  $region7: #{transformer_encoder_layer.1} parent=0 // pred_check_branch
    %12 = sbr.rel (0) target = $region9
  $region8: #{transformer_encoder_layer.1} parent=0 // pred_region
    _
  $region9: #{transformer_encoder_layer.1} parent=0 // pred_fallthru
    _
  // Predicated region
  $region10: #{transformer_encoder_layer.1} parent=0 // pred_check
    _
  $region11: #{transformer_encoder_layer.1} parent=0 // pred_check_branch
    %14 = sbr.rel (0) target = $region13
  $region12: #{transformer_encoder_layer.1} parent=0 // pred_region
    _
  $region13: #{transformer_encoder_layer.1} parent=0 // pred_fallthru
    _
  // Predicated region
  $region14: #{transformer_encoder_layer.1} parent=0 // pred_check
    _
  $region15: #{transformer_encoder_layer.1} parent=0 // pred_check_branch
    %16 = sbr.rel (0) target = $region17
  $region16: #{transformer_encoder_layer.1} parent=0 // pred_region
    _
  $region17: #{transformer_encoder_layer.1} parent=0 // pred_fallthru
    _
  %v17 = vld [vmem:[%s0] sm:$0xff]
  %v18 = vld [vmem:[%s0 + $0x8] sm:$0xff]
  %v19 = vld [vmem:[%s1] sm:$0xff]
  %v20 = vld [vmem:[%s1 + $0x8] sm:$0xff]
  %v21 = vld [vmem:[%s1 + $0x10] sm:$0xff]
  %v22 = vld [vmem:[%s1 + $0x18] sm:$0xff]
  %v23 = vld [vmem:[%s1 + $0x20] sm:$0xff]
  %v24 = vld [vmem:[%s1 + $0x28] sm:$0xff]
  %v25 = vld [vmem:[%s1 + $0x30] sm:$0xff]
  %v26 = vld [vmem:[%s1 + $0x38] sm:$0xff]
  %v27 = vld [vmem:[%s1 + $0x40] sm:$0xff]
  %v28 = vld [vmem:[%s1 + $0x48] sm:$0xff]
  %v29 = vld [vmem:[%s1 + $0x50] sm:$0xff]
  %v30 = vld [vmem:[%s1 + $0x58] sm:$0xff]
  %v31 = vld [vmem:[%s3] ss:$8 sm:$0x7]
  %v33 = vlaneseq
  %v34 = vshrl.u32 %v33, 7
  %v35 = vsub.s32 0, %v34
  %v36 = vrot.slane %v31, %v35
  %v37 = vlaneseq
  %v38 = vshrl.u32 %v37, 7
  %v39 = vsub.s32 1, %v38
  %v40 = vrot.slane %v31, %v39
  %v41 = vlaneseq
  %v42 = vshrl.u32 %v41, 7
  %v43 = vsub.s32 2, %v42
  %v44 = vrot.slane %v31, %v43
  %vm48 = vcmask 261120
  %v50 = vsel %vm48, %v17, 0
  %v53 = vsel %vm48, %v18, 0
  %55 = vmatprep.subr.mxu0 %v20
  %56 = vmatpush1.msra.mxu0 %v19
  %57 = vmatprep.subr.mxu0 %v23
  %58 = vmatpush1.msra.mxu0 %v22
  %59 = vmatprep.subr.mxu0 %v26
  %60 = vmatpush1.msra.mxu0 %v25
  %61 = vmatprep.subr.mxu0 %v29
  %62 = vmatpush1.msra.mxu0 %v28
  %63 = vmatprep.subr.mxu0 0.0
  %64 = vmatpush1.msra.mxu0 0.0
  %65 = vmatprep.subr.mxu0 0.0
  %66 = vmatpush1.msra.mxu0 0.0
  %67 = vmatprep.subr.mxu0 0.0
  %68 = vmatpush1.msra.mxu0 0.0
  %69 = vmatprep.subr.mxu0 0.0
  %70 = vmatpush1.msra.mxu0 0.0
  %71 = vmatprep.subr.mxu0 0.0
  %72 = vmatpush1.msra.mxu0 0.0
  %73 = vmatprep.subr.mxu0 0.0
  %74 = vmatpush1.msra.mxu0 0.0
  %75 = vmatprep.subr.mxu0 0.0
  %76 = vmatpush1.msra.mxu0 0.0
  %77 = vmatprep.subr.mxu0 0.0
  %78 = vmatpush1.msra.mxu0 0.0
  %79 = vmatprep.subr.mxu0 0.0
  %80 = vmatpush1.msra.mxu0 0.0
  %81 = vmatprep.subr.mxu0 0.0
  %82 = vmatpush1.msra.mxu0 0.0
  %83 = vmatprep.subr.mxu0 0.0
  %84 = vmatpush1.msra.mxu0 0.0
  %85 = vmatprep.subr.mxu0 0.0
  %86 = vmatpush1.msra.mxu0 0.0
  %87 = vmatprep.subr.mxu0 0.0
  %88 = vmatpush1.msra.mxu0 0.0
  %89 = vmatprep.subr.mxu0 0.0
  %90 = vmatpush1.msra.mxu0 0.0
  %91 = vmatprep.subr.mxu0 0.0
  %92 = vmatpush1.msra.mxu0 0.0
  %93 = vmatprep.subr.mxu0 0.0
  %94 = vmatpush1.msra.mxu0 0.0
  %95 = vmatprep.subr.mxu0 0.0
  %96 = vmatpush1.msra.mxu0 0.0
  %97 = vmatprep.subr.mxu0 0.0
  %98 = vmatpush1.msra.mxu0 0.0
  %99 = vmatprep.subr.mxu0 0.0
  %100 = vmatpush1.msra.mxu0 0.0
  %101 = vmatprep.subr.mxu0 0.0
  %102 = vmatpush1.msra.mxu0 0.0
  %103 = vmatprep.subr.mxu0 0.0
  %104 = vmatpush1.msra.mxu0 0.0
  %105 = vmatprep.subr.mxu0 0.0
  %106 = vmatpush1.msra.mxu0 0.0
  %107 = vmatprep.subr.mxu0 0.0
  %108 = vmatpush1.msra.mxu0 0.0
  %109 = vmatprep.subr.mxu0 0.0
  %110 = vmatpush1.msra.mxu0 0.0
  %111 = vmatprep.subr.mxu0 0.0
  %112 = vmatpush1.msra.mxu0 0.0
  %113 = vmatprep.subr.mxu0 0.0
  %114 = vmatpush1.msra.mxu0 0.0
  %115 = vmatprep.subr.mxu0 0.0
  %116 = vmatpush1.msra.mxu0 0.0
  %117 = vmatprep.subr.mxu0 0.0
  %118 = vmatpush1.msra.mxu0 0.0
  %119 = vmatprep.mubr.f32.mxu0 0.0
  %120 = vmatmul.mubr.f32.gmra.mrb[0].mxu0 %v50
  %v121 = vpop.f32.mrb[0].mxu0
  %v122 = vadd.f32 %v36, %v121
  %v123 = vpop.f32.mrb[0].mxu0
  %v124 = vadd.f32 %v40, %v123
  %125 = vmatprep.mubr.f32.mxu0 0.0
  %126 = vmatmul.mubr.f32.gmra.mrb[0].mxu0 %v53
  %v127 = vpop.f32.mrb[0].mxu0
  %v128 = vadd.f32 %v36, %v127
  %v129 = vpop.f32.mrb[0].mxu0
  %v130 = vadd.f32 %v40, %v129
  %131 = vdwg.mxu0
  %132 = vmatprep.subr.mxu0 0.0
  %133 = vmatpush1.msra.mxu0 %v21
  %134 = vmatprep.subr.mxu0 0.0
  %135 = vmatpush1.msra.mxu0 %v24
  %136 = vmatprep.subr.mxu0 0.0
  %137 = vmatpush1.msra.mxu0 %v27
  %138 = vmatprep.subr.mxu0 0.0
  %139 = vmatpush1.msra.mxu0 %v30
  %140 = vmatprep.subr.mxu0 0.0
  %141 = vmatpush1.msra.mxu0 0.0
  %142 = vmatprep.subr.mxu0 0.0
  %143 = vmatpush1.msra.mxu0 0.0
  %144 = vmatprep.subr.mxu0 0.0
  %145 = vmatpush1.msra.mxu0 0.0
  %146 = vmatprep.subr.mxu0 0.0
  %147 = vmatpush1.msra.mxu0 0.0
  %148 = vmatprep.subr.mxu0 0.0
  %149 = vmatpush1.msra.mxu0 0.0
  %150 = vmatprep.subr.mxu0 0.0
  %151 = vmatpush1.msra.mxu0 0.0
  %152 = vmatprep.subr.mxu0 0.0
  %153 = vmatpush1.msra.mxu0 0.0
  %154 = vmatprep.subr.mxu0 0.0
  %155 = vmatpush1.msra.mxu0 0.0
  %156 = vmatprep.subr.mxu0 0.0
  %157 = vmatpush1.msra.mxu0 0.0
  %158 = vmatprep.subr.mxu0 0.0
  %159 = vmatpush1.msra.mxu0 0.0
  %160 = vmatprep.subr.mxu0 0.0
  %161 = vmatpush1.msra.mxu0 0.0
  %162 = vmatprep.subr.mxu0 0.0
  %163 = vmatpush1.msra.mxu0 0.0
  %164 = vmatprep.subr.mxu0 0.0
  %165 = vmatpush1.msra.mxu0 0.0
  %166 = vmatprep.subr.mxu0 0.0
  %167 = vmatpush1.msra.mxu0 0.0
  %168 = vmatprep.subr.mxu0 0.0
  %169 = vmatpush1.msra.mxu0 0.0
  %170 = vmatprep.subr.mxu0 0.0
  %171 = vmatpush1.msra.mxu0 0.0
  %172 = vmatprep.subr.mxu0 0.0
  %173 = vmatpush1.msra.mxu0 0.0
  %174 = vmatprep.subr.mxu0 0.0
  %175 = vmatpush1.msra.mxu0 0.0
  %176 = vmatprep.subr.mxu0 0.0
  %177 = vmatpush1.msra.mxu0 0.0
  %178 = vmatprep.subr.mxu0 0.0
  %179 = vmatpush1.msra.mxu0 0.0
  %180 = vmatprep.subr.mxu0 0.0
  %181 = vmatpush1.msra.mxu0 0.0
  %182 = vmatprep.subr.mxu0 0.0
  %183 = vmatpush1.msra.mxu0 0.0
  %184 = vmatprep.subr.mxu0 0.0
  %185 = vmatpush1.msra.mxu0 0.0
  %186 = vmatprep.subr.mxu0 0.0
  %187 = vmatpush1.msra.mxu0 0.0
  %188 = vmatprep.subr.mxu0 0.0
  %189 = vmatpush1.msra.mxu0 0.0
  %190 = vmatprep.subr.mxu0 0.0
  %191 = vmatpush1.msra.mxu0 0.0
  %192 = vmatprep.subr.mxu0 0.0
  %193 = vmatpush1.msra.mxu0 0.0
  %194 = vmatprep.subr.mxu0 0.0
  %195 = vmatpush1.msra.mxu0 0.0
  %196 = vmatprep.mubr.f32.mxu0 0.0
  %197 = vmatmul.mubr.f32.gmra.mrb[0].mxu0 %v50
  %v198 = vpop.f32.mrb[0].mxu0
  %v199 = vadd.f32 %v44, %v198
  %v200 = vpop.f32.mrb[0].mxu0
  %201 = vmatprep.mubr.f32.mxu0 0.0
  %202 = vmatmul.mubr.f32.gmra.mrb[0].mxu0 %v53
  %v203 = vpop.f32.mrb[0].mxu0
  %v204 = vadd.f32 %v44, %v203
  %v205 = vpop.f32.mrb[0].mxu0
  %206 = vdwg.mxu0
  %v207 = vld [vmem:[%s3 + $0x90] sm:$0xff]
  %v208 = vld [vmem:[%s3 + $0xa8] sm:$0xff]
  %209 = vmatprep.subr.mxu0 0.0
  %210 = vmatpush1.xpose.msra.mxu0 %v124
  %211 = vmatprep.subr.mxu0 0.0
  %212 = vmatpush1.xpose.msra.mxu0 %v130
  %213 = vmatprep.subr.mxu0 0.0
  %214 = vmatpush1.xpose.msra.mxu0 0.0
  %215 = vmatprep.subr.mxu0 0.0
  %216 = vmatpush1.xpose.msra.mxu0 0.0
  %217 = vmatprep.subr.mxu0 0.0
  %218 = vmatpush1.xpose.msra.mxu0 0.0
  %219 = vmatprep.subr.mxu0 0.0
  %220 = vmatpush1.xpose.msra.mxu0 0.0
  %221 = vmatprep.subr.mxu0 0.0
  %222 = vmatpush1.xpose.msra.mxu0 0.0
  %223 = vmatprep.subr.mxu0 0.0
  %224 = vmatpush1.xpose.msra.mxu0 0.0
  %225 = vmatprep.subr.mxu0 0.0
  %226 = vmatpush1.xpose.msra.mxu0 0.0
  %227 = vmatprep.subr.mxu0 0.0
  %228 = vmatpush1.xpose.msra.mxu0 0.0
  %229 = vmatprep.subr.mxu0 0.0
  %230 = vmatpush1.xpose.msra.mxu0 0.0
  %231 = vmatprep.subr.mxu0 0.0
  %232 = vmatpush1.xpose.msra.mxu0 0.0
  %233 = vmatprep.subr.mxu0 0.0
  %234 = vmatpush1.xpose.msra.mxu0 0.0
  %235 = vmatprep.subr.mxu0 0.0
  %236 = vmatpush1.xpose.msra.mxu0 0.0
  %237 = vmatprep.subr.mxu0 0.0
  %238 = vmatpush1.xpose.msra.mxu0 0.0
  %239 = vmatprep.subr.mxu0 0.0
  %240 = vmatpush1.xpose.msra.mxu0 0.0
  %241 = vmatprep.subr.mxu0 0.0
  %242 = vmatpush1.xpose.msra.mxu0 0.0
  %243 = vmatprep.subr.mxu0 0.0
  %244 = vmatpush1.xpose.msra.mxu0 0.0
  %245 = vmatprep.subr.mxu0 0.0
  %246 = vmatpush1.xpose.msra.mxu0 0.0
  %247 = vmatprep.subr.mxu0 0.0
  %248 = vmatpush1.xpose.msra.mxu0 0.0
  %249 = vmatprep.subr.mxu0 0.0
  %250 = vmatpush1.xpose.msra.mxu0 0.0
  %251 = vmatprep.subr.mxu0 0.0
  %252 = vmatpush1.xpose.msra.mxu0 0.0
  %253 = vmatprep.subr.mxu0 0.0
  %254 = vmatpush1.xpose.msra.mxu0 0.0
  %255 = vmatprep.subr.mxu0 0.0
  %256 = vmatpush1.xpose.msra.mxu0 0.0
  %257 = vmatprep.subr.mxu0 0.0
  %258 = vmatpush1.xpose.msra.mxu0 0.0
  %259 = vmatprep.subr.mxu0 0.0
  %260 = vmatpush1.xpose.msra.mxu0 0.0
  %261 = vmatprep.subr.mxu0 0.0
  %262 = vmatpush1.xpose.msra.mxu0 0.0
  %263 = vmatprep.subr.mxu0 0.0
  %264 = vmatpush1.xpose.msra.mxu0 0.0
  %265 = vmatprep.subr.mxu0 0.0
  %266 = vmatpush1.xpose.msra.mxu0 0.0
  %267 = vmatprep.subr.mxu0 0.0
  %268 = vmatpush1.xpose.msra.mxu0 0.0
  %269 = vmatprep.subr.mxu0 0.0
  %270 = vmatpush1.xpose.msra.mxu0 0.0
  %271 = vmatprep.subr.mxu0 0.0
  %272 = vmatpush1.xpose.msra.mxu0 0.0
  %273 = vmatprep.mubr.f32.mxu0 0.0
  %274 = vmatmul.mubr.f32.gmra.mrb[0].mxu0 %v122
  %v275 = vpop.f32.mrb[0].mxu0
  %v276 = vadd.f32 %v207, %v275
  %v277 = vpop.f32.mrb[0].mxu0
  %278 = vmatprep.mubr.f32.mxu0 0.0
  %279 = vmatmul.mubr.f32.gmra.mrb[0].mxu0 %v128
  %v280 = vpop.f32.mrb[0].mxu0
  %v281 = vadd.f32 %v208, %v280
  %v282 = vpop.f32.mrb[0].mxu0
  %283 = vdwg.mxu0
  %vm284 = vcmask 130048
  %v285 = vsel %vm284, %v276, -inf
  %286 = vmax.xlane.f32.xlu0 %v285
  %v287 = vpop.xlane.xlu0 %286
  %v288 = vsel %vm284, %v281, -inf
  %289 = vmax.xlane.f32.xlu0 %v288
  %v290 = vpop.xlane.xlu0 %289
  %v291 = vsub.f32 %v276, %v287
  %v292 = vsub.f32 %v281, %v290
  %v293 = vmul.f32 %v291, 1.442695
  %v294 = vpow.pop %v293
  %v295 = vmul.f32 %v292, 1.442695
  %v296 = vpow.pop %v295
  %v297 = vsel %vm284, %v294, 0.0
  %298 = vadd.xlane.f32.xlu0 %v297
  %v299 = vpop.xlane.xlu0 %298
  %v300 = vsel %vm284, %v296, 0.0
  %301 = vadd.xlane.f32.xlu0 %v300
  %v302 = vpop.xlane.xlu0 %301
  %v303 = vrcp.pop %v299
  %v304 = vmul.f32 %v294, %v303
  %v305 = vrcp.pop %v302
  %v306 = vmul.f32 %v296, %v305
  %v308 = vsel %vm284, %v304, 0
  %v311 = vsel %vm284, %v306, 0
  %313 = vmatprep.subr.mxu0 0.0
  %314 = vmatpush1.msra.mxu0 %v199
  %315 = vmatprep.subr.mxu0 0.0
  %316 = vmatpush1.msra.mxu0 %v204
  %317 = vmatprep.subr.mxu0 0.0
  %318 = vmatpush1.msra.mxu0 0.0
  %319 = vmatprep.subr.mxu0 0.0
  %320 = vmatpush1.msra.mxu0 0.0
  %321 = vmatprep.subr.mxu0 0.0
  %322 = vmatpush1.msra.mxu0 0.0
  %323 = vmatprep.subr.mxu0 0.0
  %324 = vmatpush1.msra.mxu0 0.0
  %325 = vmatprep.subr.mxu0 0.0
  %326 = vmatpush1.msra.mxu0 0.0
  %327 = vmatprep.subr.mxu0 0.0
  %328 = vmatpush1.msra.mxu0 0.0
  %329 = vmatprep.subr.mxu0 0.0
  %330 = vmatpush1.msra.mxu0 0.0
  %331 = vmatprep.subr.mxu0 0.0
  %332 = vmatpush1.msra.mxu0 0.0
  %333 = vmatprep.subr.mxu0 0.0
  %334 = vmatpush1.msra.mxu0 0.0
  %335 = vmatprep.subr.mxu0 0.0
  %336 = vmatpush1.msra.mxu0 0.0
  %337 = vmatprep.subr.mxu0 0.0
  %338 = vmatpush1.msra.mxu0 0.0
  %339 = vmatprep.subr.mxu0 0.0
  %340 = vmatpush1.msra.mxu0 0.0
  %341 = vmatprep.subr.mxu0 0.0
  %342 = vmatpush1.msra.mxu0 0.0
  %343 = vmatprep.subr.mxu0 0.0
  %344 = vmatpush1.msra.mxu0 0.0
  %345 = vmatprep.subr.mxu0 0.0
  %346 = vmatpush1.msra.mxu0 0.0
  %347 = vmatprep.subr.mxu0 0.0
  %348 = vmatpush1.msra.mxu0 0.0
  %349 = vmatprep.subr.mxu0 0.0
  %350 = vmatpush1.msra.mxu0 0.0
  %351 = vmatprep.subr.mxu0 0.0
  %352 = vmatpush1.msra.mxu0 0.0
  %353 = vmatprep.subr.mxu0 0.0
  %354 = vmatpush1.msra.mxu0 0.0
  %355 = vmatprep.subr.mxu0 0.0
  %356 = vmatpush1.msra.mxu0 0.0
  %357 = vmatprep.subr.mxu0 0.0
  %358 = vmatpush1.msra.mxu0 0.0
  %359 = vmatprep.subr.mxu0 0.0
  %360 = vmatpush1.msra.mxu0 0.0
  %361 = vmatprep.subr.mxu0 0.0
  %362 = vmatpush1.msra.mxu0 0.0
  %363 = vmatprep.subr.mxu0 0.0
  %364 = vmatpush1.msra.mxu0 0.0
  %365 = vmatprep.subr.mxu0 0.0
  %366 = vmatpush1.msra.mxu0 0.0
  %367 = vmatprep.subr.mxu0 0.0
  %368 = vmatpush1.msra.mxu0 0.0
  %369 = vmatprep.subr.mxu0 0.0
  %370 = vmatpush1.msra.mxu0 0.0
  %371 = vmatprep.subr.mxu0 0.0
  %372 = vmatpush1.msra.mxu0 0.0
  %373 = vmatprep.subr.mxu0 0.0
  %374 = vmatpush1.msra.mxu0 0.0
  %375 = vmatprep.subr.mxu0 0.0
  %376 = vmatpush1.msra.mxu0 0.0
  %377 = vmatprep.mubr.f32.mxu0 0.0
  %378 = vmatmul.mubr.f32.gmra.mrb[0].mxu0 %v308
  %v379 = vpop.f32.mrb[0].mxu0
  %v380 = vadd.f32 0.0, %v379
  %v381 = vpop.f32.mrb[0].mxu0
  %382 = vmatprep.mubr.f32.mxu0 0.0
  %383 = vmatmul.mubr.f32.gmra.mrb[0].mxu0 %v311
  %v384 = vpop.f32.mrb[0].mxu0
  %v385 = vadd.f32 0.0, %v384
  %v386 = vpop.f32.mrb[0].mxu0
  %387 = vdwg.mxu0
  %v388 = vld [vmem:[%s2] sm:$0xff]
  %v389 = vld [vmem:[%s2 + $0x8] sm:$0xff]
  %v390 = vld [vmem:[%s2 + $0x10] sm:$0xff]
  %v391 = vld [vmem:[%s2 + $0x18] sm:$0xff]
  %v392 = vld [vmem:[%s2 + $0x20] sm:$0xff]
  %v393 = vld [vmem:[%s2 + $0x28] sm:$0xff]
  %v394 = vld [vmem:[%s2 + $0x30] sm:$0xff]
  %v395 = vld [vmem:[%s2 + $0x38] sm:$0xff]
  %v396 = vld [vmem:[%s2 + $0x40] sm:$0xff]
  %v397 = vld [vmem:[%s2 + $0x48] sm:$0xff]
  %v398 = vld [vmem:[%s2 + $0x50] sm:$0xff]
  %v399 = vld [vmem:[%s2 + $0x58] sm:$0xff]
  %v400 = vld [vmem:[%s2 + $0x60] sm:$0xff]
  %v401 = vld [vmem:[%s2 + $0x68] sm:$0xff]
  %v402 = vld [vmem:[%s2 + $0x70] sm:$0xff]
  %v403 = vld [vmem:[%s2 + $0x78] sm:$0xff]
  %v404 = vld [vmem:[%s3 + $0x18] ss:$0 sm:$0xff]
  %405 = vmatprep.subr.mxu0 0.0
  %406 = vmatpush1.msra.mxu0 %v388
  %407 = vmatprep.subr.mxu0 0.0
  %408 = vmatpush1.msra.mxu0 %v389
  %409 = vmatprep.subr.mxu0 0.0
  %410 = vmatpush1.msra.mxu0 %v390
  %411 = vmatprep.subr.mxu0 0.0
  %412 = vmatpush1.msra.mxu0 %v391
  %413 = vmatprep.subr.mxu0 0.0
  %414 = vmatpush1.msra.mxu0 %v392
  %415 = vmatprep.subr.mxu0 0.0
  %416 = vmatpush1.msra.mxu0 %v393
  %417 = vmatprep.subr.mxu0 0.0
  %418 = vmatpush1.msra.mxu0 %v394
  %419 = vmatprep.subr.mxu0 0.0
  %420 = vmatpush1.msra.mxu0 %v395
  %421 = vmatprep.subr.mxu0 0.0
  %422 = vmatpush1.msra.mxu0 %v396
  %423 = vmatprep.subr.mxu0 0.0
  %424 = vmatpush1.msra.mxu0 %v397
  %425 = vmatprep.subr.mxu0 0.0
  %426 = vmatpush1.msra.mxu0 %v398
  %427 = vmatprep.subr.mxu0 0.0
  %428 = vmatpush1.msra.mxu0 %v399
  %429 = vmatprep.subr.mxu0 0.0
  %430 = vmatpush1.msra.mxu0 %v400
  %431 = vmatprep.subr.mxu0 0.0
  %432 = vmatpush1.msra.mxu0 %v401
  %433 = vmatprep.subr.mxu0 0.0
  %434 = vmatpush1.msra.mxu0 %v402
  %435 = vmatprep.subr.mxu0 0.0
  %436 = vmatpush1.msra.mxu0 %v403
  %437 = vmatprep.subr.mxu0 0.0
  %438 = vmatpush1.msra.mxu0 0.0
  %439 = vmatprep.subr.mxu0 0.0
  %440 = vmatpush1.msra.mxu0 0.0
  %441 = vmatprep.subr.mxu0 0.0
  %442 = vmatpush1.msra.mxu0 0.0
  %443 = vmatprep.subr.mxu0 0.0
  %444 = vmatpush1.msra.mxu0 0.0
  %445 = vmatprep.subr.mxu0 0.0
  %446 = vmatpush1.msra.mxu0 0.0
  %447 = vmatprep.subr.mxu0 0.0
  %448 = vmatpush1.msra.mxu0 0.0
  %449 = vmatprep.subr.mxu0 0.0
  %450 = vmatpush1.msra.mxu0 0.0
  %451 = vmatprep.subr.mxu0 0.0
  %452 = vmatpush1.msra.mxu0 0.0
  %453 = vmatprep.subr.mxu0 0.0
  %454 = vmatpush1.msra.mxu0 0.0
  %455 = vmatprep.subr.mxu0 0.0
  %456 = vmatpush1.msra.mxu0 0.0
  %457 = vmatprep.subr.mxu0 0.0
  %458 = vmatpush1.msra.mxu0 0.0
  %459 = vmatprep.subr.mxu0 0.0
  %460 = vmatpush1.msra.mxu0 0.0
  %461 = vmatprep.subr.mxu0 0.0
  %462 = vmatpush1.msra.mxu0 0.0
  %463 = vmatprep.subr.mxu0 0.0
  %464 = vmatpush1.msra.mxu0 0.0
  %465 = vmatprep.subr.mxu0 0.0
  %466 = vmatpush1.msra.mxu0 0.0
  %467 = vmatprep.subr.mxu0 0.0
  %468 = vmatpush1.msra.mxu0 0.0
  %469 = vmatprep.mubr.f32.mxu0 0.0
  %470 = vmatmul.mubr.f32.gmra.mrb[0].mxu0 %v380
  %v471 = vpop.f32.mrb[0].mxu0
  %v472 = vadd.f32 %v404, %v471
  %v473 = vpop.f32.mrb[0].mxu0
  %474 = vmatprep.mubr.f32.mxu0 0.0
  %475 = vmatmul.mubr.f32.gmra.mrb[0].mxu0 %v385
  %v476 = vpop.f32.mrb[0].mxu0
  %v477 = vadd.f32 %v404, %v476
  %v478 = vpop.f32.mrb[0].mxu0
  %479 = vdwg.mxu0
  %v480 = vadd.f32 %v17, %v472
  %v481 = vadd.f32 %v18, %v477
  %v482 = vsel %vm48, %v480, 0.0
  %483 = vadd.xlane.f32.xlu0 %v482
  %v484 = vpop.xlane.xlu0 %483
  %v485 = vsel %vm48, %v481, 0.0
  %486 = vadd.xlane.f32.xlu0 %v485
  %v487 = vpop.xlane.xlu0 %486
  %v488 = vrcp.pop 32.0
  %v489 = vmul.f32 %v484, %v488
  %v490 = vmul.f32 %v487, %v488
  %v491 = vsub.f32 %v480, %v489
  %v492 = vsub.f32 %v481, %v490
  %v493 = vmul.f32 %v491, %v491
  %v494 = vmul.f32 %v492, %v492
  %v495 = vsel %vm48, %v493, 0.0
  %496 = vadd.xlane.f32.xlu0 %v495
  %v497 = vpop.xlane.xlu0 %496
  %v498 = vsel %vm48, %v494, 0.0
  %499 = vadd.xlane.f32.xlu0 %v498
  %v500 = vpop.xlane.xlu0 %499
  %v501 = vmul.f32 %v497, %v488
  %v502 = vmul.f32 %v500, %v488
  %v503 = vadd.f32 %v501, 1e-05
  %v504 = vadd.f32 %v502, 1e-05
  %v505 = vrsqrt.pop %v503
  %v506 = vrsqrt.pop %v504
  %v507 = vmul.f32 %v491, %v505
  %v508 = vmul.f32 %v492, %v506
  %v509 = vld [vmem:[%s3 + $0x30] ss:$0 sm:$0xff]
  %v510 = vmul.f32 %v507, %v509
  %v511 = vmul.f32 %v508, %v509
  %v512 = vld [vmem:[%s3 + $0x48] ss:$0 sm:$0xff]
  %v513 = vadd.f32 %v510, %v512
  %v514 = vadd.f32 %v511, %v512
  %v515 = vld [vmem:[%s2 + $0x80] sm:$0xff]
  %v516 = vld [vmem:[%s2 + $0x88] sm:$0xff]
  %v517 = vld [vmem:[%s2 + $0x90] sm:$0xff]
  %v518 = vld [vmem:[%s2 + $0x98] sm:$0xff]
  %v519 = vld [vmem:[%s3 + $0x60] ss:$0 sm:$0xff]
  %v521 = vsel %vm48, %v513, 0
  %v524 = vsel %vm48, %v514, 0
  %526 = vmatprep.subr.mxu0 0.0
  %527 = vmatpush1.msra.mxu0 %v515
  %528 = vmatprep.subr.mxu0 0.0
  %529 = vmatpush1.msra.mxu0 %v516
  %530 = vmatprep.subr.mxu0 0.0
  %531 = vmatpush1.msra.mxu0 %v517
  %532 = vmatprep.subr.mxu0 0.0
  %533 = vmatpush1.msra.mxu0 %v518
  %534 = vmatprep.subr.mxu0 0.0
  %535 = vmatpush1.msra.mxu0 0.0
  %536 = vmatprep.subr.mxu0 0.0
  %537 = vmatpush1.msra.mxu0 0.0
  %538 = vmatprep.subr.mxu0 0.0
  %539 = vmatpush1.msra.mxu0 0.0
  %540 = vmatprep.subr.mxu0 0.0
  %541 = vmatpush1.msra.mxu0 0.0
  %542 = vmatprep.subr.mxu0 0.0
  %543 = vmatpush1.msra.mxu0 0.0
  %544 = vmatprep.subr.mxu0 0.0
  %545 = vmatpush1.msra.mxu0 0.0
  %546 = vmatprep.subr.mxu0 0.0
  %547 = vmatpush1.msra.mxu0 0.0
  %548 = vmatprep.subr.mxu0 0.0
  %549 = vmatpush1.msra.mxu0 0.0
  %550 = vmatprep.subr.mxu0 0.0
  %551 = vmatpush1.msra.mxu0 0.0
  %552 = vmatprep.subr.mxu0 0.0
  %553 = vmatpush1.msra.mxu0 0.0
  %554 = vmatprep.subr.mxu0 0.0
  %555 = vmatpush1.msra.mxu0 0.0
  %556 = vmatprep.subr.mxu0 0.0
  %557 = vmatpush1.msra.mxu0 0.0
  %558 = vmatprep.subr.mxu0 0.0
  %559 = vmatpush1.msra.mxu0 0.0
  %560 = vmatprep.subr.mxu0 0.0
  %561 = vmatpush1.msra.mxu0 0.0
  %562 = vmatprep.subr.mxu0 0.0
  %563 = vmatpush1.msra.mxu0 0.0
  %564 = vmatprep.subr.mxu0 0.0
  %565 = vmatpush1.msra.mxu0 0.0
  %566 = vmatprep.subr.mxu0 0.0
  %567 = vmatpush1.msra.mxu0 0.0
  %568 = vmatprep.subr.mxu0 0.0
  %569 = vmatpush1.msra.mxu0 0.0
  %570 = vmatprep.subr.mxu0 0.0
  %571 = vmatpush1.msra.mxu0 0.0
  %572 = vmatprep.subr.mxu0 0.0
  %573 = vmatpush1.msra.mxu0 0.0
  %574 = vmatprep.subr.mxu0 0.0
  %575 = vmatpush1.msra.mxu0 0.0
  %576 = vmatprep.subr.mxu0 0.0
  %577 = vmatpush1.msra.mxu0 0.0
  %578 = vmatprep.subr.mxu0 0.0
  %579 = vmatpush1.msra.mxu0 0.0
  %580 = vmatprep.subr.mxu0 0.0
  %581 = vmatpush1.msra.mxu0 0.0
  %582 = vmatprep.subr.mxu0 0.0
  %583 = vmatpush1.msra.mxu0 0.0
  %584 = vmatprep.subr.mxu0 0.0
  %585 = vmatpush1.msra.mxu0 0.0
  %586 = vmatprep.subr.mxu0 0.0
  %587 = vmatpush1.msra.mxu0 0.0
  %588 = vmatprep.subr.mxu0 0.0
  %589 = vmatpush1.msra.mxu0 0.0
  %590 = vmatprep.mubr.f32.mxu0 0.0
  %591 = vmatmul.mubr.f32.gmra.mrb[0].mxu0 %v521
  %v592 = vpop.f32.mrb[0].mxu0
  %v593 = vadd.f32 %v519, %v592
  %v594 = vpop.f32.mrb[0].mxu0
  %595 = vmatprep.mubr.f32.mxu0 0.0
  %596 = vmatmul.mubr.f32.gmra.mrb[0].mxu0 %v524
  %v597 = vpop.f32.mrb[0].mxu0
  %v598 = vadd.f32 %v519, %v597
  %v599 = vpop.f32.mrb[0].mxu0
  %600 = vdwg.mxu0
  %v601 = vmax.f32 %v593, 0.0
  %v602 = vmax.f32 %v598, 0.0
  %v603 = vld [vmem:[%s2 + $0xa0] sm:$0xff]
  %v604 = vld [vmem:[%s2 + $0xa8] sm:$0xff]
  %v605 = vld [vmem:[%s2 + $0xb0] sm:$0xff]
  %v606 = vld [vmem:[%s2 + $0xb8] sm:$0xff]
  %v607 = vld [vmem:[%s2 + $0xc0] sm:$0xff]
  %v608 = vld [vmem:[%s2 + $0xc8] sm:$0xff]
  %v609 = vld [vmem:[%s2 + $0xd0] sm:$0xff]
  %v610 = vld [vmem:[%s2 + $0xd8] sm:$0xff]
  %v611 = vld [vmem:[%s3 + $0x78] ss:$0 sm:$0xff]
  %vm612 = vcmask 523264
  %v614 = vsel %vm612, %v601, 0
  %v617 = vsel %vm612, %v602, 0
  %619 = vmatprep.subr.mxu0 0.0
  %620 = vmatpush1.msra.mxu0 %v603
  %621 = vmatprep.subr.mxu0 0.0
  %622 = vmatpush1.msra.mxu0 %v604
  %623 = vmatprep.subr.mxu0 0.0
  %624 = vmatpush1.msra.mxu0 %v605
  %625 = vmatprep.subr.mxu0 0.0
  %626 = vmatpush1.msra.mxu0 %v606
  %627 = vmatprep.subr.mxu0 0.0
  %628 = vmatpush1.msra.mxu0 %v607
  %629 = vmatprep.subr.mxu0 0.0
  %630 = vmatpush1.msra.mxu0 %v608
  %631 = vmatprep.subr.mxu0 0.0
  %632 = vmatpush1.msra.mxu0 %v609
  %633 = vmatprep.subr.mxu0 0.0
  %634 = vmatpush1.msra.mxu0 %v610
  %635 = vmatprep.subr.mxu0 0.0
  %636 = vmatpush1.msra.mxu0 0.0
  %637 = vmatprep.subr.mxu0 0.0
  %638 = vmatpush1.msra.mxu0 0.0
  %639 = vmatprep.subr.mxu0 0.0
  %640 = vmatpush1.msra.mxu0 0.0
  %641 = vmatprep.subr.mxu0 0.0
  %642 = vmatpush1.msra.mxu0 0.0
  %643 = vmatprep.subr.mxu0 0.0
  %644 = vmatpush1.msra.mxu0 0.0
  %645 = vmatprep.subr.mxu0 0.0
  %646 = vmatpush1.msra.mxu0 0.0
  %647 = vmatprep.subr.mxu0 0.0
  %648 = vmatpush1.msra.mxu0 0.0
  %649 = vmatprep.subr.mxu0 0.0
  %650 = vmatpush1.msra.mxu0 0.0
  %651 = vmatprep.subr.mxu0 0.0
  %652 = vmatpush1.msra.mxu0 0.0
  %653 = vmatprep.subr.mxu0 0.0
  %654 = vmatpush1.msra.mxu0 0.0
  %655 = vmatprep.subr.mxu0 0.0
  %656 = vmatpush1.msra.mxu0 0.0
  %657 = vmatprep.subr.mxu0 0.0
  %658 = vmatpush1.msra.mxu0 0.0
  %659 = vmatprep.subr.mxu0 0.0
  %660 = vmatpush1.msra.mxu0 0.0
  %661 = vmatprep.subr.mxu0 0.0
  %662 = vmatpush1.msra.mxu0 0.0
  %663 = vmatprep.subr.mxu0 0.0
  %664 = vmatpush1.msra.mxu0 0.0
  %665 = vmatprep.subr.mxu0 0.0
  %666 = vmatpush1.msra.mxu0 0.0
  %667 = vmatprep.subr.mxu0 0.0
  %668 = vmatpush1.msra.mxu0 0.0
  %669 = vmatprep.subr.mxu0 0.0
  %670 = vmatpush1.msra.mxu0 0.0
  %671 = vmatprep.subr.mxu0 0.0
  %672 = vmatpush1.msra.mxu0 0.0
  %673 = vmatprep.subr.mxu0 0.0
  %674 = vmatpush1.msra.mxu0 0.0
  %675 = vmatprep.subr.mxu0 0.0
  %676 = vmatpush1.msra.mxu0 0.0
  %677 = vmatprep.subr.mxu0 0.0
  %678 = vmatpush1.msra.mxu0 0.0
  %679 = vmatprep.subr.mxu0 0.0
  %680 = vmatpush1.msra.mxu0 0.0
  %681 = vmatprep.subr.mxu0 0.0
  %682 = vmatpush1.msra.mxu0 0.0
  %683 = vmatprep.mubr.f32.mxu0 0.0
  %684 = vmatmul.mubr.f32.gmra.mrb[0].mxu0 %v614
  %v685 = vpop.f32.mrb[0].mxu0
  %v686 = vadd.f32 %v611, %v685
  %v687 = vpop.f32.mrb[0].mxu0
  %688 = vmatprep.mubr.f32.mxu0 0.0
  %689 = vmatmul.mubr.f32.gmra.mrb[0].mxu0 %v617
  %v690 = vpop.f32.mrb[0].mxu0
  %v691 = vadd.f32 %v611, %v690
  %v692 = vpop.f32.mrb[0].mxu0
  %693 = vdwg.mxu0
  %v694 = vadd.f32 %v513, %v686
  %v695 = vadd.f32 %v514, %v691
  %696 = vst.msk [vmem:[%s4] sm:$0xff] %vm48, %v694
  %697 = vst.msk [vmem:[%s4 + $0x8] sm:$0xff] %vm48, %v695
  // Predicated region
  $region18: #{transformer_encoder_layer.1} parent=0 // pred_check
    _
  $region19: #{transformer_encoder_layer.1} parent=0 // pred_check_branch
    %699 = sbr.rel (0) target = $region21
  $region20: #{transformer_encoder_layer.1} parent=0 // pred_region
    _
  $region21: #{transformer_encoder_layer.1} parent=0 // pred_fallthru
    _
  // Predicated region
  $region22: #{transformer_encoder_layer.1} parent=0 // pred_check
    _
  $region23: #{transformer_encoder_layer.1} parent=0 // pred_check_branch
    %701 = sbr.rel (0) target = $region25
  $region24: #{transformer_encoder_layer.1} parent=0 // pred_region
    _
  $region25: #{transformer_encoder_layer.1} parent=0 // pred_fallthru
    _

</llo_original>
